<compile_context>
chip_gen: v7x
topology: tpu7x:2x2x1
jax: 0.10.0
libtpu: 0.0.40
codegen_flags: <defaults>
</compile_context>

<pallas_src>
import functools
import math

import jax
import jax.numpy as jnp
from jax.experimental import pallas as pl
from jax.experimental.pallas import tpu as pltpu


def _round_up(x, m):
    return (x + m - 1) // m * m


def _cdiv(a, b):
    return (a + b - 1) // b


def _gelu_tanh(x):
    c = math.sqrt(2.0 / math.pi)
    return 0.5 * x * (1.0 + jnp.tanh(c * (x + 0.044715 * (x * x * x))))


# ------------------------------- kernels ------------------------------------

def _geglu_kernel(x_ref, wv_ref, bv_ref, wg_ref, bg_ref, o_ref, *, compute_dtype):
    # Single K step: the full (tr, dim_in) x tile and (dim_in, tc) weight tiles
    # are resident; weights stay in VMEM across the (inner) row-tile axis.
    x = x_ref[...].astype(compute_dtype)
    val = jnp.dot(x, wv_ref[...].astype(compute_dtype),
                  preferred_element_type=jnp.float32) + bv_ref[...]
    gate = jnp.dot(x, wg_ref[...].astype(compute_dtype),
                   preferred_element_type=jnp.float32) + bg_ref[...]
    o_ref[...] = (val * _gelu_tanh(gate)).astype(o_ref.dtype)


def _geglu_kernel_ksplit(x_ref, wv_ref, bv_ref, wg_ref, bg_ref, o_ref,
                         accv_ref, accg_ref, *, compute_dtype):
    # K-tiled variant for large dim_in: accumulate both halves in f32 scratch,
    # apply bias + GELU on the final K step.
    k = pl.program_id(2)

    @pl.when(k == 0)
    def _():
        accv_ref[...] = jnp.zeros_like(accv_ref)
        accg_ref[...] = jnp.zeros_like(accg_ref)

    x = x_ref[...].astype(compute_dtype)
    accv_ref[...] += jnp.dot(x, wv_ref[...].astype(compute_dtype),
                             preferred_element_type=jnp.float32)
    accg_ref[...] += jnp.dot(x, wg_ref[...].astype(compute_dtype),
                             preferred_element_type=jnp.float32)

    @pl.when(k == pl.num_programs(2) - 1)
    def _():
        val = accv_ref[...] + bv_ref[...]
        gate = accg_ref[...] + bg_ref[...]
        o_ref[...] = (val * _gelu_tanh(gate)).astype(o_ref.dtype)


# ------------------------------- tiling helpers -----------------------------

def _pick_tc(dim_out, tile_cols):
    if dim_out % 128 != 0:
        return dim_out                      # full extent (masked stores, small dims)
    for gran in (256, 128):                 # prefer 256-wide N (v6e/v7x MXU)
        if dim_out % gran == 0:
            tc = max(gran, min(tile_cols, dim_out) // gran * gran)
            while dim_out % tc != 0:
                tc -= gran
            return tc
    return dim_out


def _pick_tk(dim_in, tile_k):
    if dim_in <= tile_k or dim_in % 128 != 0:
        # TODO(synk): very large dim_in that is not a multiple of 128 is kept
        # as a single K step (no padding of the contraction axis here).
        return dim_in
    tk = max(128, min(tile_k, dim_in) // 128 * 128)
    while dim_in % tk != 0:
        tk -= 128
    return tk


# ------------------------------- wrapper ------------------------------------

def geglu(x, w, b, *, tile_rows=256, tile_cols=256, tile_k=2048,
          use_bf16_matmul=True):
    """x: (..., dim_in); w: (dim_in, 2*dim_out) stored (in, out); b: (2*dim_out,)."""
    *lead, dim_in = x.shape
    assert w.shape[0] == dim_in and w.shape[1] % 2 == 0
    dim_out = w.shape[1] // 2
    assert b.shape == (2 * dim_out,)

    rows = math.prod(lead) if lead else 1
    x2 = x.reshape(rows, dim_in)

    # Row tiling: balanced tiles (multiple of 8 sublanes) to minimize padding.
    n_row = max(1, _cdiv(rows, tile_rows))
    tr = _round_up(_cdiv(rows, n_row), 8)
    rows_p = _round_up(rows, tr)
    if rows_p != rows:
        x2 = jnp.pad(x2, ((0, rows_p - rows), (0, 0)))

    tc = _pick_tc(dim_out, tile_cols)
    tk = _pick_tk(dim_in, tile_k)
    n_col = dim_out // tc
    n_row_t = rows_p // tr
    n_k = dim_in // tk

    compute_dtype = (jnp.bfloat16
                     if (use_bf16_matmul and x.dtype == jnp.float32)
                     else x.dtype)

    b2 = b.reshape(1, 2 * dim_out)

    # Keep the projection matrix whole whenever the column tile is lane-aligned:
    # pass w / b twice and offset the gate half by dim_out//tc block columns in
    # the index_map (no wrapper-side slice -> no extra HBM copy of the weights).
    if tc % 128 == 0:
        w_val_in, w_gate_in = w, w
        b_val_in, b_gate_in = b2, b2
        goff = dim_out // tc
    else:
        w_val_in, w_gate_in = w[:, :dim_out], w[:, dim_out:]
        b_val_in, b_gate_in = b2[:, :dim_out], b2[:, dim_out:]
        goff = 0

    if n_k == 1:
        kernel = functools.partial(_geglu_kernel, compute_dtype=compute_dtype)
        # Column tiles outer, row tiles inner -> weight tiles stay resident
        # across the row axis; both axes "parallel" for megacore sharding.
        grid = (n_col, n_row_t)
        in_specs = [
            pl.BlockSpec((tr, dim_in), lambda j, i: (i, 0)),          # x rows
            pl.BlockSpec((dim_in, tc), lambda j, i: (0, j)),          # W (value)
            pl.BlockSpec((1, tc),      lambda j, i: (0, j)),          # b (value)
            pl.BlockSpec((dim_in, tc), lambda j, i: (0, j + goff)),   # W (gate)
            pl.BlockSpec((1, tc),      lambda j, i: (0, j + goff)),   # b (gate)
        ]
        out_specs = pl.BlockSpec((tr, tc), lambda j, i: (i, j))
        scratch = []
        dims = ("parallel", "parallel")
    else:
        kernel = functools.partial(_geglu_kernel_ksplit, compute_dtype=compute_dtype)
        grid = (n_col, n_row_t, n_k)
        in_specs = [
            pl.BlockSpec((tr, tk), lambda j, i, k: (i, k)),           # x rows
            pl.BlockSpec((tk, tc), lambda j, i, k: (k, j)),           # W (value)
            pl.BlockSpec((1, tc),  lambda j, i, k: (0, j)),           # b (value)
            pl.BlockSpec((tk, tc), lambda j, i, k: (k, j + goff)),    # W (gate)
            pl.BlockSpec((1, tc),  lambda j, i, k: (0, j + goff)),    # b (gate)
        ]
        out_specs = pl.BlockSpec((tr, tc), lambda j, i, k: (i, j))
        scratch = [pltpu.VMEM((tr, tc), jnp.float32),
                   pltpu.VMEM((tr, tc), jnp.float32)]
        dims = ("parallel", "parallel", "arbitrary")

    # Scoped-VMEM estimate (double-buffered ins/outs + f32 accumulators).
    x_isz = x.dtype.itemsize
    w_isz = w.dtype.itemsize
    est = 2 * (tr * tk * x_isz + 2 * tk * tc * w_isz + 2 * tc * w_isz
               + tr * tc * x_isz)
    if n_k > 1:
        est += 2 * tr * tc * 4
    cp_kwargs = dict(dimension_semantics=dims)
    if est > 12 * 1024 * 1024:
        # Raise the default scoped limit (16/32 MiB depending on generation)
        # with headroom; capped so it stays valid on v7x's 64 MiB VMEM.
        cp_kwargs["vmem_limit_bytes"] = min(int(est * 1.5), 64 * 1024 * 1024)

    out = pl.pallas_call(
        kernel,
        grid=grid,
        in_specs=in_specs,
        out_specs=out_specs,
        out_shape=jax.ShapeDtypeStruct((rows_p, dim_out), x.dtype),
        scratch_shapes=scratch,
        compiler_params=pltpu.CompilerParams(**cp_kwargs),
    )(x2, w_val_in, b_val_in, w_gate_in, b_gate_in)

    out = out[:rows]
    return out.reshape(*lead, dim_out)


# --------------------------------- main --------------------------------------

if __name__ == "__main__":
    B, N = 2, 8            # batch, seq
    DIM_IN = 128           # model dim
    DIM_OUT = 256          # GEGLU output dim (projection has 2*DIM_OUT cols)

    key = jax.random.PRNGKey(0)
    kx, kw, kb = jax.random.split(key, 3)
    x = jax.random.normal(kx, (B, N, DIM_IN), dtype=jnp.float32)

    # torch nn.Linear default init: U(-1/sqrt(fan_in), 1/sqrt(fan_in))
    bound = 1.0 / math.sqrt(DIM_IN)
    w = jax.random.uniform(kw, (DIM_IN, 2 * DIM_OUT), jnp.float32, -bound, bound)
    b = jax.random.uniform(kb, (2 * DIM_OUT,), jnp.float32, -bound, bound)

    out = jax.block_until_ready(geglu(x, w, b))
    assert out.shape == (B, N, DIM_OUT) and out.dtype == jnp.float32

    # Pure-JAX references.
    def ref_geglu(xr, wr, br):
        proj = jnp.dot(xr, wr, precision=jax.lax.Precision.HIGHEST) + br
        val, gate = jnp.split(proj, 2, axis=-1)
        return val * jax.nn.gelu(gate, approximate=False)

    ref_f32 = ref_geglu(x, w, b)
    # Matched-precision reference: same bf16 operand rounding as the kernel.
    xb = x.astype(jnp.bfloat16).astype(jnp.float32)
    wb = w.astype(jnp.bfloat16).astype(jnp.float32)
    ref_matched = ref_geglu(xb, wb, b)

    err_matched = float(jnp.max(jnp.abs(out - ref_matched)))
    err_f32 = float(jnp.max(jnp.abs(out - ref_f32)))
    assert err_matched < 5e-3, f"matched-precision max abs error too large: {err_matched}"
    assert err_f32 < 5e-2, f"fp32-reference max abs error too large: {err_f32}"

    print("KERNEL_OK")
</pallas_src>

<mosaic_0001>
module attributes {stable_mosaic.version = 11 : i64} {
  func.func @_geglu_kernel(%arg0: i32, %arg1: i32, %arg2: memref<16x128xf32, #tpu.memory_space<vmem>>, %arg3: memref<128x256xf32, #tpu.memory_space<vmem>>, %arg4: memref<1x256xf32, #tpu.memory_space<vmem>>, %arg5: memref<128x256xf32, #tpu.memory_space<vmem>>, %arg6: memref<1x256xf32, #tpu.memory_space<vmem>>, %arg7: memref<16x256xf32, #tpu.memory_space<vmem>>) attributes {dimension_semantics = [#tpu.dimension_semantics<parallel>, #tpu.dimension_semantics<parallel>], iteration_bounds = array<i64: 1, 1>, scalar_prefetch = 0 : i64, scratch_operands = 0 : i64, tpu.core_type = #tpu.core_type<tc>, window_params = [{transform_indices = @transform_0, window_bounds = array<i64: 16, 128>}, {transform_indices = @transform_1, window_bounds = array<i64: 128, 256>}, {transform_indices = @transform_2, window_bounds = array<i64: 1, 256>}, {transform_indices = @transform_3, window_bounds = array<i64: 128, 256>}, {transform_indices = @transform_4, window_bounds = array<i64: 1, 256>}, {transform_indices = @transform_5, window_bounds = array<i64: 16, 256>}]} {
    %c0 = arith.constant 0 : index
    %c0_0 = arith.constant 0 : index
    %0 = vector.load %arg2[%c0, %c0_0] : memref<16x128xf32, #tpu.memory_space<vmem>>, vector<16x128xf32>
    %1 = arith.truncf %0 : vector<16x128xf32> to vector<16x128xbf16>
    %c0_1 = arith.constant 0 : index
    %c0_2 = arith.constant 0 : index
    %2 = vector.load %arg3[%c0_1, %c0_2] : memref<128x256xf32, #tpu.memory_space<vmem>>, vector<128x256xf32>
    %3 = arith.truncf %2 : vector<128x256xf32> to vector<128x256xbf16>
    %cst = arith.constant dense<0.000000e+00> : vector<16x256xf32>
    %4 = tpu.matmul %1, %3, %cst {dimension_numbers = #tpu.dot_dimension_numbers<[1], [0], [0], [1], [0, 0, 1, 1], [], []>} : vector<16x128xbf16>, vector<128x256xbf16>, vector<16x256xf32> -> vector<16x256xf32>
    %c0_3 = arith.constant 0 : index
    %c0_4 = arith.constant 0 : index
    %5 = vector.load %arg4[%c0_3, %c0_4] : memref<1x256xf32, #tpu.memory_space<vmem>>, vector<1x256xf32>
    %6 = vector.broadcast %5 : vector<1x256xf32> to vector<16x256xf32>
    %7 = arith.addf %4, %6 : vector<16x256xf32>
    %c0_5 = arith.constant 0 : index
    %c0_6 = arith.constant 0 : index
    %8 = vector.load %arg5[%c0_5, %c0_6] : memref<128x256xf32, #tpu.memory_space<vmem>>, vector<128x256xf32>
    %9 = arith.truncf %8 : vector<128x256xf32> to vector<128x256xbf16>
    %cst_7 = arith.constant dense<0.000000e+00> : vector<16x256xf32>
    %10 = tpu.matmul %1, %9, %cst_7 {dimension_numbers = #tpu.dot_dimension_numbers<[1], [0], [0], [1], [0, 0, 1, 1], [], []>} : vector<16x128xbf16>, vector<128x256xbf16>, vector<16x256xf32> -> vector<16x256xf32>
    %c0_8 = arith.constant 0 : index
    %c0_9 = arith.constant 0 : index
    %11 = vector.load %arg6[%c0_8, %c0_9] : memref<1x256xf32, #tpu.memory_space<vmem>>, vector<1x256xf32>
    %12 = vector.broadcast %11 : vector<1x256xf32> to vector<16x256xf32>
    %13 = arith.addf %10, %12 : vector<16x256xf32>
    %cst_10 = arith.constant 5.000000e-01 : f32
    %14 = vector.broadcast %cst_10 : f32 to vector<16x256xf32>
    %15 = arith.mulf %14, %13 : vector<16x256xf32>
    %16 = arith.mulf %13, %13 : vector<16x256xf32>
    %17 = arith.mulf %16, %13 : vector<16x256xf32>
    %cst_11 = arith.constant 4.471500e-02 : f32
    %18 = vector.broadcast %cst_11 : f32 to vector<16x256xf32>
    %19 = arith.mulf %18, %17 : vector<16x256xf32>
    %20 = arith.addf %13, %19 : vector<16x256xf32>
    %cst_12 = arith.constant 0.797884583 : f32
    %21 = vector.broadcast %cst_12 : f32 to vector<16x256xf32>
    %22 = arith.mulf %21, %20 : vector<16x256xf32>
    %23 = math.tanh %22 : vector<16x256xf32>
    %cst_13 = arith.constant 1.000000e+00 : f32
    %24 = vector.broadcast %cst_13 : f32 to vector<16x256xf32>
    %25 = arith.addf %24, %23 : vector<16x256xf32>
    %26 = arith.mulf %15, %25 : vector<16x256xf32>
    %27 = arith.mulf %7, %26 : vector<16x256xf32>
    %c0_14 = arith.constant 0 : index
    %c0_15 = arith.constant 0 : index
    %28 = vector.load %arg7[%c0_14, %c0_15] : memref<16x256xf32, #tpu.memory_space<vmem>>, vector<16x256xf32>
    tpu.vector_store %arg7[%c0_14, %c0_15], %27 {strides = array<i32>} : memref<16x256xf32, #tpu.memory_space<vmem>>, vector<16x256xf32>,
    return
  }
  func.func @transform_0(%arg0: i32, %arg1: i32) -> (i32, i32) {
    %c0_i32 = arith.constant 0 : i32
    %c0_i32_0 = arith.constant 0 : i32
    return %arg1, %c0_i32 : i32, i32
  }
  func.func @transform_1(%arg0: i32, %arg1: i32) -> (i32, i32) {
    %c0_i32 = arith.constant 0 : i32
    %c0_i32_0 = arith.constant 0 : i32
    return %c0_i32, %arg0 : i32, i32
  }
  func.func @transform_2(%arg0: i32, %arg1: i32) -> (i32, i32) {
    %c0_i32 = arith.constant 0 : i32
    %c0_i32_0 = arith.constant 0 : i32
    return %c0_i32, %arg0 : i32, i32
  }
  func.func @transform_3(%arg0: i32, %arg1: i32) -> (i32, i32) {
    %c1_i32 = arith.constant 1 : i32
    %0 = arith.addi %arg0, %c1_i32 : i32
    %c0_i32 = arith.constant 0 : i32
    %c0_i32_0 = arith.constant 0 : i32
    return %c0_i32, %0 : i32, i32
  }
  func.func @transform_4(%arg0: i32, %arg1: i32) -> (i32, i32) {
    %c1_i32 = arith.constant 1 : i32
    %0 = arith.addi %arg0, %c1_i32 : i32
    %c0_i32 = arith.constant 0 : i32
    %c0_i32_0 = arith.constant 0 : i32
    return %c0_i32, %0 : i32, i32
  }
  func.func @transform_5(%arg0: i32, %arg1: i32) -> (i32, i32) {
    %c0_i32 = arith.constant 0 : i32
    return %arg1, %arg0 : i32, i32
  }
}

</mosaic_0001>

<llo_original>
// kernel: tpu_custom_call.1
$region0: #{tpu_custom_call.1}
  #allocation0 [shape = 'u32[]', space=smem, size = 0x4, offset = 0x4, fixed_abs, tag = 'smem constant byte address 0x4 - core index']
  #allocation1 [shape = 'u32[144,128]{1,0:T(1,128)}', space=vmem, size = 0x12000, scoped, tag = 'internal scratch']
  %s0 = inlined_call_operand.hbm [shape: f32[16,128], index: 0, kind: input, shape index: {}]
  %s1 = inlined_call_operand.hbm [shape: f32[128,512], index: 1, kind: input, shape index: {}]
  %s2 = inlined_call_operand.vmem [shape: f32[1,512], index: 2, kind: input, shape index: {}]
  %s3 = inlined_call_operand.hbm [shape: f32[128,512], index: 3, kind: input, shape index: {}]
  %s4 = inlined_call_operand.vmem [shape: f32[1,512], index: 4, kind: input, shape index: {}]
  %s5 = inlined_call_operand.hbm [shape: f32[16,256], index: 5, kind: output, shape index: {}]
  %s6 = sld [smem:[#allocation0]]
  $region42: #{tpu_custom_call.1} parent=0
    _
  %s8 = ssub.s32 1, %s6
  %s9 = scalar_select 0, %s8, %s6
  $region1: #{tpu_custom_call.1} parent=0
    #allocation2 [shape = 'u8[8192]{0}', space=vmem, size = 0x2000, scoped, tag = 'input window, operand 0, single buffered']
    #allocation3 [shape = 's32[1]{0}', space=sflag, size = 0x4, scoped, tag = 'scoped memory for tpu_custom_call.1']
    #allocation4 [shape = 's32[1]{0}', space=sflag, size = 0x4, scoped, tag = 'scoped memory for tpu_custom_call.1']
    #allocation5 [shape = 'u8[131072]{0}', space=vmem, size = 0x20000, scoped, tag = 'input window, operand 1, single buffered']
    #allocation6 [shape = 's32[1]{0}', space=sflag, size = 0x4, scoped, tag = 'scoped memory for tpu_custom_call.1']
    #allocation7 [shape = 'u8[131072]{0}', space=vmem, size = 0x20000, scoped, tag = 'input window, operand 3, single buffered']
    #allocation8 [shape = 'u8[16384]{0}', space=vmem, size = 0x4000, scoped, tag = 'output window, operand 0, single buffered']
    %10 = vsyncpa [#allocation3], 0
    %11 = vsyncpa [#allocation6], 0
    %12 = vsyncpa [#allocation4], 0
    // Predicated region
    $region2: #{tpu_custom_call.1} parent=1 // pred_check
      _
    $region3: #{tpu_custom_call.1} parent=1 // pred_check_branch
      %14 = sbr.rel (0) target = $region5
    $region4: #{tpu_custom_call.1} parent=1 // pred_region
      %s16 = ssub.s32 256, 256
      %17 = vsyncadd [#allocation3], %s16
      %s18 = sshll.u32 [#allocation2], 4
      %s19 = int_to_ptr.vmem [resolvable:$true] %s18
      %24 = dma.hbm_to_vmem [thread:$0]  %s0, 256, %s19, [#allocation3], 128, 128, 8
    $region5: #{tpu_custom_call.1} parent=1 // pred_fallthru
      _
    // Predicated region
    $region6: #{tpu_custom_call.1} parent=1 // pred_check
      _
    $region7: #{tpu_custom_call.1} parent=1 // pred_check_branch
      %26 = sbr.rel (0) target = $region9
    $region8: #{tpu_custom_call.1} parent=1 // pred_region
      %s28 = ssub.s32 4096, 4096
      %29 = vsyncadd [#allocation6], %s28
      %s30 = sshll.u32 [#allocation5], 4
      %s31 = int_to_ptr.vmem [resolvable:$true] %s30
      %36 = dma.hbm_to_vmem [thread:$0]  %s1, 4096, %s31, [#allocation6], 512, 256, 16
    $region9: #{tpu_custom_call.1} parent=1 // pred_fallthru
      _
    // Predicated region
    $region10: #{tpu_custom_call.1} parent=1 // pred_check
      _
    $region11: #{tpu_custom_call.1} parent=1 // pred_check_branch
      %38 = sbr.rel (0) target = $region13
    $region12: #{tpu_custom_call.1} parent=1 // pred_region
      _
    $region13: #{tpu_custom_call.1} parent=1 // pred_fallthru
      _
    // Predicated region
    $region14: #{tpu_custom_call.1} parent=1 // pred_check
      _
    $region15: #{tpu_custom_call.1} parent=1 // pred_check_branch
      %40 = sbr.rel (0) target = $region17
    $region16: #{tpu_custom_call.1} parent=1 // pred_region
      %s41 = sadd.s32 0, 1
      %s42 = smul.u32 2, %s41
      %s44 = ssub.s32 4096, 4096
      %45 = vsyncadd [#allocation6], %s44
      %s46 = smul.addr %s42, 128
      %s47 = scalar_lea.hbm %s3, %s46
      %s48 = sshll.u32 [#allocation7], 4
      %s49 = int_to_ptr.vmem [resolvable:$true] %s48
      %54 = dma.hbm_to_vmem [thread:$0]  %s47, 4096, %s49, [#allocation6], 512, 256, 16
    $region17: #{tpu_custom_call.1} parent=1 // pred_fallthru
      _
    // Predicated region
    $region18: #{tpu_custom_call.1} parent=1 // pred_check
      _
    $region19: #{tpu_custom_call.1} parent=1 // pred_check_branch
      %56 = sbr.rel (0) target = $region21
    $region20: #{tpu_custom_call.1} parent=1 // pred_region
      %s57 = sadd.s32 0, 1
      %s58 = smul.u32 2, %s57
      %p59 = scmp.lt.s32.totalorder %s58, 3
      %s60 = scalar_select %p59, %s58, 3
      %s61 = scalar_lea.vmem %s4, %s60
      %s62 = sadd.s32 0, 1
      %s63 = smul.u32 2, %s62
    $region21: #{tpu_custom_call.1} parent=1 // pred_fallthru
      _
    // Predicated region
    $region22: #{tpu_custom_call.1} parent=1 // pred_check
      _
    $region23: #{tpu_custom_call.1} parent=1 // pred_check_branch
      %65 = sbr.rel (0) target = $region25
    $region24: #{tpu_custom_call.1} parent=1 // pred_region
      %66 = dma.done [#allocation3], 256
    $region25: #{tpu_custom_call.1} parent=1 // pred_fallthru
      _
    // Predicated region
    $region26: #{tpu_custom_call.1} parent=1 // pred_check
      _
    $region27: #{tpu_custom_call.1} parent=1 // pred_check_branch
      %68 = sbr.rel (0) target = $region29
    $region28: #{tpu_custom_call.1} parent=1 // pred_region
      %69 = dma.done [#allocation6], 4096
    $region29: #{tpu_custom_call.1} parent=1 // pred_fallthru
      _
    // Predicated region
    $region30: #{tpu_custom_call.1} parent=1 // pred_check
      _
    $region31: #{tpu_custom_call.1} parent=1 // pred_check_branch
      %71 = sbr.rel (0) target = $region33
    $region32: #{tpu_custom_call.1} parent=1 // pred_region
      %72 = dma.done [#allocation6], 4096
    $region33: #{tpu_custom_call.1} parent=1 // pred_fallthru
      _
    %s73 = sadd.s32 0, 1
    %s74 = smul.u32 2, %s73
    %p75 = scmp.lt.s32.totalorder %s74, 3
    %s76 = scalar_select %p75, %s74, 3
    %s77 = scalar_lea.vmem %s4, %s76
    %s78 = sadd.s32 0, 1
    %s79 = smul.u32 2, %s78
    %s80 = sadd.s32 0, 1
    %s81 = smul.u32 2, %s80
    %p82 = scmp.lt.s32.totalorder %s81, 3
    %s83 = scalar_select %p82, %s81, 3
    %s84 = scalar_lea.vmem %s4, %s83
    %s85 = sadd.s32 0, 1
    %s86 = smul.u32 2, %s85
    %v88 = vld [vmem:[#allocation2] sm:$0xff]
    %v89 = vld [vmem:[#allocation2 + $0x8] sm:$0xff]
    %v90 = vpack.c.bf16 %v89, %v88
    %v91 = vld [vmem:[#allocation5] sm:$0xff]
    %v92 = vld [vmem:[#allocation5 + $0x8] sm:$0xff]
    %v93 = vld [vmem:[#allocation5 + $0x10] sm:$0xff]
    %v94 = vld [vmem:[#allocation5 + $0x18] sm:$0xff]
    %v95 = vld [vmem:[#allocation5 + $0x20] sm:$0xff]
    %v96 = vld [vmem:[#allocation5 + $0x28] sm:$0xff]
    %v97 = vld [vmem:[#allocation5 + $0x30] sm:$0xff]
    %v98 = vld [vmem:[#allocation5 + $0x38] sm:$0xff]
    %v99 = vld [vmem:[#allocation5 + $0x40] sm:$0xff]
    %v100 = vld [vmem:[#allocation5 + $0x48] sm:$0xff]
    %v101 = vld [vmem:[#allocation5 + $0x50] sm:$0xff]
    %v102 = vld [vmem:[#allocation5 + $0x58] sm:$0xff]
    %v103 = vld [vmem:[#allocation5 + $0x60] sm:$0xff]
    %v104 = vld [vmem:[#allocation5 + $0x68] sm:$0xff]
    %v105 = vld [vmem:[#allocation5 + $0x70] sm:$0xff]
    %v106 = vld [vmem:[#allocation5 + $0x78] sm:$0xff]
    %v107 = vld [vmem:[#allocation5 + $0x80] sm:$0xff]
    %v108 = vld [vmem:[#allocation5 + $0x88] sm:$0xff]
    %v109 = vld [vmem:[#allocation5 + $0x90] sm:$0xff]
    %v110 = vld [vmem:[#allocation5 + $0x98] sm:$0xff]
    %v111 = vld [vmem:[#allocation5 + $0xa0] sm:$0xff]
    %v112 = vld [vmem:[#allocation5 + $0xa8] sm:$0xff]
    %v113 = vld [vmem:[#allocation5 + $0xb0] sm:$0xff]
    %v114 = vld [vmem:[#allocation5 + $0xb8] sm:$0xff]
    %v115 = vld [vmem:[#allocation5 + $0xc0] sm:$0xff]
    %v116 = vld [vmem:[#allocation5 + $0xc8] sm:$0xff]
    %v117 = vld [vmem:[#allocation5 + $0xd0] sm:$0xff]
    %v118 = vld [vmem:[#allocation5 + $0xd8] sm:$0xff]
    %v119 = vld [vmem:[#allocation5 + $0xe0] sm:$0xff]
    %v120 = vld [vmem:[#allocation5 + $0xe8] sm:$0xff]
    %v121 = vld [vmem:[#allocation5 + $0xf0] sm:$0xff]
    %v122 = vld [vmem:[#allocation5 + $0xf8] sm:$0xff]
    %v123 = vpack.c.bf16 %v93, %v91
    %v124 = vpack.c.bf16 %v94, %v92
    %v125 = vpack.c.bf16 %v97, %v95
    %v126 = vpack.c.bf16 %v98, %v96
    %v127 = vpack.c.bf16 %v101, %v99
    %v128 = vpack.c.bf16 %v102, %v100
    %v129 = vpack.c.bf16 %v105, %v103
    %v130 = vpack.c.bf16 %v106, %v104
    %v131 = vpack.c.bf16 %v109, %v107
    %v132 = vpack.c.bf16 %v110, %v108
    %v133 = vpack.c.bf16 %v113, %v111
    %v134 = vpack.c.bf16 %v114, %v112
    %v135 = vpack.c.bf16 %v117, %v115
    %v136 = vpack.c.bf16 %v118, %v116
    %v137 = vpack.c.bf16 %v121, %v119
    %v138 = vpack.c.bf16 %v122, %v120
    %v139 = vld [vmem:[%s2] sm:$0x3]
    %v141 = vlaneseq
    %v142 = vshrl.u32 %v141, 7
    %v143 = vsub.s32 0, %v142
    %v144 = vrot.slane %v139, %v143
    %v145 = vlaneseq
    %v146 = vshrl.u32 %v145, 7
    %v147 = vsub.s32 1, %v146
    %v148 = vrot.slane %v139, %v147
    %151 = vmatprep.subr.bf16.mxu0 %v124
    %152 = vmatpush1.bf16.msra.mxu0 %v123
    %153 = vmatprep.subr.bf16.mxu0 %v126
    %154 = vmatpush1.bf16.msra.mxu0 %v125
    %155 = vmatprep.subr.bf16.mxu0 %v128
    %156 = vmatpush1.bf16.msra.mxu0 %v127
    %157 = vmatprep.subr.bf16.mxu0 %v130
    %158 = vmatpush1.bf16.msra.mxu0 %v129
    %159 = vmatprep.subr.bf16.mxu0 %v132
    %160 = vmatpush1.bf16.msra.mxu0 %v131
    %161 = vmatprep.subr.bf16.mxu0 %v134
    %162 = vmatpush1.bf16.msra.mxu0 %v133
    %163 = vmatprep.subr.bf16.mxu0 %v136
    %164 = vmatpush1.bf16.msra.mxu0 %v135
    %165 = vmatprep.subr.bf16.mxu0 %v138
    %166 = vmatpush1.bf16.msra.mxu0 %v137
    %167 = vmatprep.subr.bf16.mxu0 0
    %168 = vmatpush1.bf16.msra.mxu0 0
    %169 = vmatprep.subr.bf16.mxu0 0
    %170 = vmatpush1.bf16.msra.mxu0 0
    %171 = vmatprep.subr.bf16.mxu0 0
    %172 = vmatpush1.bf16.msra.mxu0 0
    %173 = vmatprep.subr.bf16.mxu0 0
    %174 = vmatpush1.bf16.msra.mxu0 0
    %175 = vmatprep.subr.bf16.mxu0 0
    %176 = vmatpush1.bf16.msra.mxu0 0
    %177 = vmatprep.subr.bf16.mxu0 0
    %178 = vmatpush1.bf16.msra.mxu0 0
    %179 = vmatprep.subr.bf16.mxu0 0
    %180 = vmatpush1.bf16.msra.mxu0 0
    %181 = vmatprep.subr.bf16.mxu0 0
    %182 = vmatpush1.bf16.msra.mxu0 0
    %183 = vmatprep.mubr.bf16.mxu0 0
    %184 = vmatmul.mubr.bf16.gmra.mrb[0].mxu0 %v90
    %v185 = vpop.f32.mrb[0].mxu0
    %v186 = vadd.f32 %v144, %v185
    %v187 = vpop.f32.mrb[0].mxu0
    %v188 = vadd.f32 %v148, %v187
    %v189 = vpop.f32.mrb[0].mxu0
    %v190 = vadd.f32 %v144, %v189
    %v191 = vpop.f32.mrb[0].mxu0
    %v192 = vadd.f32 %v148, %v191
    %193 = vdwg.mxu0
    %v194 = vld [vmem:[#allocation7] sm:$0xff]
    %v195 = vld [vmem:[#allocation7 + $0x8] sm:$0xff]
    %v196 = vld [vmem:[#allocation7 + $0x10] sm:$0xff]
    %v197 = vld [vmem:[#allocation7 + $0x18] sm:$0xff]
    %v198 = vld [vmem:[#allocation7 + $0x20] sm:$0xff]
    %v199 = vld [vmem:[#allocation7 + $0x28] sm:$0xff]
    %v200 = vld [vmem:[#allocation7 + $0x30] sm:$0xff]
    %v201 = vld [vmem:[#allocation7 + $0x38] sm:$0xff]
    %v202 = vld [vmem:[#allocation7 + $0x40] sm:$0xff]
    %v203 = vld [vmem:[#allocation7 + $0x48] sm:$0xff]
    %v204 = vld [vmem:[#allocation7 + $0x50] sm:$0xff]
    %v205 = vld [vmem:[#allocation7 + $0x58] sm:$0xff]
    %v206 = vld [vmem:[#allocation7 + $0x60] sm:$0xff]
    %v207 = vld [vmem:[#allocation7 + $0x68] sm:$0xff]
    %v208 = vld [vmem:[#allocation7 + $0x70] sm:$0xff]
    %v209 = vld [vmem:[#allocation7 + $0x78] sm:$0xff]
    %v210 = vld [vmem:[#allocation7 + $0x80] sm:$0xff]
    %v211 = vld [vmem:[#allocation7 + $0x88] sm:$0xff]
    %v212 = vld [vmem:[#allocation7 + $0x90] sm:$0xff]
    %v213 = vld [vmem:[#allocation7 + $0x98] sm:$0xff]
    %v214 = vld [vmem:[#allocation7 + $0xa0] sm:$0xff]
    %v215 = vld [vmem:[#allocation7 + $0xa8] sm:$0xff]
    %v216 = vld [vmem:[#allocation7 + $0xb0] sm:$0xff]
    %v217 = vld [vmem:[#allocation7 + $0xb8] sm:$0xff]
    %v218 = vld [vmem:[#allocation7 + $0xc0] sm:$0xff]
    %v219 = vld [vmem:[#allocation7 + $0xc8] sm:$0xff]
    %v220 = vld [vmem:[#allocation7 + $0xd0] sm:$0xff]
    %v221 = vld [vmem:[#allocation7 + $0xd8] sm:$0xff]
    %v222 = vld [vmem:[#allocation7 + $0xe0] sm:$0xff]
    %v223 = vld [vmem:[#allocation7 + $0xe8] sm:$0xff]
    %v224 = vld [vmem:[#allocation7 + $0xf0] sm:$0xff]
    %v225 = vld [vmem:[#allocation7 + $0xf8] sm:$0xff]
    %v226 = vpack.c.bf16 %v196, %v194
    %v227 = vpack.c.bf16 %v197, %v195
    %v228 = vpack.c.bf16 %v200, %v198
    %v229 = vpack.c.bf16 %v201, %v199
    %v230 = vpack.c.bf16 %v204, %v202
    %v231 = vpack.c.bf16 %v205, %v203
    %v232 = vpack.c.bf16 %v208, %v206
    %v233 = vpack.c.bf16 %v209, %v207
    %v234 = vpack.c.bf16 %v212, %v210
    %v235 = vpack.c.bf16 %v213, %v211
    %v236 = vpack.c.bf16 %v216, %v214
    %v237 = vpack.c.bf16 %v217, %v215
    %v238 = vpack.c.bf16 %v220, %v218
    %v239 = vpack.c.bf16 %v221, %v219
    %v240 = vpack.c.bf16 %v224, %v222
    %v241 = vpack.c.bf16 %v225, %v223
    %v242 = vld [vmem:[%s84] sm:$0x3]
    %v244 = vlaneseq
    %v245 = vshrl.u32 %v244, 7
    %v246 = vsub.s32 0, %v245
    %v247 = vrot.slane %v242, %v246
    %v248 = vlaneseq
    %v249 = vshrl.u32 %v248, 7
    %v250 = vsub.s32 1, %v249
    %v251 = vrot.slane %v242, %v250
    %254 = vmatprep.subr.bf16.mxu0 %v227
    %255 = vmatpush1.bf16.msra.mxu0 %v226
    %256 = vmatprep.subr.bf16.mxu0 %v229
    %257 = vmatpush1.bf16.msra.mxu0 %v228
    %258 = vmatprep.subr.bf16.mxu0 %v231
    %259 = vmatpush1.bf16.msra.mxu0 %v230
    %260 = vmatprep.subr.bf16.mxu0 %v233
    %261 = vmatpush1.bf16.msra.mxu0 %v232
    %262 = vmatprep.subr.bf16.mxu0 %v235
    %263 = vmatpush1.bf16.msra.mxu0 %v234
    %264 = vmatprep.subr.bf16.mxu0 %v237
    %265 = vmatpush1.bf16.msra.mxu0 %v236
    %266 = vmatprep.subr.bf16.mxu0 %v239
    %267 = vmatpush1.bf16.msra.mxu0 %v238
    %268 = vmatprep.subr.bf16.mxu0 %v241
    %269 = vmatpush1.bf16.msra.mxu0 %v240
    %270 = vmatprep.subr.bf16.mxu0 0
    %271 = vmatpush1.bf16.msra.mxu0 0
    %272 = vmatprep.subr.bf16.mxu0 0
    %273 = vmatpush1.bf16.msra.mxu0 0
    %274 = vmatprep.subr.bf16.mxu0 0
    %275 = vmatpush1.bf16.msra.mxu0 0
    %276 = vmatprep.subr.bf16.mxu0 0
    %277 = vmatpush1.bf16.msra.mxu0 0
    %278 = vmatprep.subr.bf16.mxu0 0
    %279 = vmatpush1.bf16.msra.mxu0 0
    %280 = vmatprep.subr.bf16.mxu0 0
    %281 = vmatpush1.bf16.msra.mxu0 0
    %282 = vmatprep.subr.bf16.mxu0 0
    %283 = vmatpush1.bf16.msra.mxu0 0
    %284 = vmatprep.subr.bf16.mxu0 0
    %285 = vmatpush1.bf16.msra.mxu0 0
    %286 = vmatprep.mubr.bf16.mxu0 0
    %287 = vmatmul.mubr.bf16.gmra.mrb[0].mxu0 %v90
    %v288 = vpop.f32.mrb[0].mxu0
    %v289 = vadd.f32 %v247, %v288
    %v290 = vpop.f32.mrb[0].mxu0
    %v291 = vadd.f32 %v251, %v290
    %v292 = vpop.f32.mrb[0].mxu0
    %v293 = vadd.f32 %v247, %v292
    %v294 = vpop.f32.mrb[0].mxu0
    %v295 = vadd.f32 %v251, %v294
    %296 = vdwg.mxu0
    %v297 = vmul.f32 %v289, 0.5
    %v298 = vmul.f32 %v291, 0.5
    %v299 = vmul.f32 %v293, 0.5
    %v300 = vmul.f32 %v295, 0.5
    %v301 = vmul.f32 %v289, %v289
    %v302 = vmul.f32 %v291, %v291
    %v303 = vmul.f32 %v293, %v293
    %v304 = vmul.f32 %v295, %v295
    %v305 = vmul.f32 %v301, %v289
    %v306 = vmul.f32 %v302, %v291
    %v307 = vmul.f32 %v303, %v293
    %v308 = vmul.f32 %v304, %v295
    %v309 = vmul.f32 %v305, 0.044715
    %v310 = vmul.f32 %v306, 0.044715
    %v311 = vmul.f32 %v307, 0.044715
    %v312 = vmul.f32 %v308, 0.044715
    %v313 = vadd.f32 %v289, %v309
    %v314 = vadd.f32 %v291, %v310
    %v315 = vadd.f32 %v293, %v311
    %v316 = vadd.f32 %v295, %v312
    %v317 = vmul.f32 %v313, 0.7978846
    %v318 = vmul.f32 %v314, 0.7978846
    %v319 = vmul.f32 %v315, 0.7978846
    %v320 = vmul.f32 %v316, 0.7978846
    %v321 = vtanh.pop %v317
    %v322 = vtanh.pop %v318
    %v323 = vtanh.pop %v319
    %v324 = vtanh.pop %v320
    %v325 = vadd.f32 %v321, 1.0
    %v326 = vadd.f32 %v322, 1.0
    %v327 = vadd.f32 %v323, 1.0
    %v328 = vadd.f32 %v324, 1.0
    %v329 = vmul.f32 %v297, %v325
    %v330 = vmul.f32 %v298, %v326
    %v331 = vmul.f32 %v299, %v327
    %v332 = vmul.f32 %v300, %v328
    %v333 = vmul.f32 %v186, %v329
    %v334 = vmul.f32 %v188, %v330
    %v335 = vmul.f32 %v190, %v331
    %v336 = vmul.f32 %v192, %v332
    %337 = vst [vmem:[#allocation8] sm:$0xff] %v333
    %338 = vst [vmem:[#allocation8 + $0x8] sm:$0xff] %v334
    %339 = vst [vmem:[#allocation8 + $0x10] sm:$0xff] %v335
    %340 = vst [vmem:[#allocation8 + $0x18] sm:$0xff] %v336
    // Predicated region
    $region34: #{tpu_custom_call.1} parent=1 // pred_check
      _
    $region35: #{tpu_custom_call.1} parent=1 // pred_check_branch
      %342 = sbr.rel (0) target = $region37
    $region36: #{tpu_custom_call.1} parent=1 // pred_region
      %s344 = ssub.s32 512, 512
      %345 = vsyncadd [#allocation4], %s344
      %s346 = sshll.u32 [#allocation8], 4
      %s347 = int_to_ptr.vmem [resolvable:$true] %s346
      %352 = dma.vmem_to_hbm [thread:$0]  %s347, 512, %s5, [#allocation4], 256, 256, 16
    $region37: #{tpu_custom_call.1} parent=1 // pred_fallthru
      _
    // Predicated region
    $region38: #{tpu_custom_call.1} parent=1 // pred_check
      _
    $region39: #{tpu_custom_call.1} parent=1 // pred_check_branch
      %354 = sbr.rel (0) target = $region41
    $region40: #{tpu_custom_call.1} parent=1 // pred_region
      %355 = dma.done [#allocation4], 512
    $region41: #{tpu_custom_call.1} parent=1 // pred_fallthru
      _
    %356 = vsyncpa [#allocation3], 1
    %357 = vsyncpa [#allocation6], 1
    %358 = vsyncpa [#allocation4], 1

</llo_original>
